<compile_context>
chip_gen: v7x
topology: tpu7x:2x2x1
jax: 0.10.0
libtpu: 0.0.40
codegen_flags: <defaults>
</compile_context>

<pallas_src>
import functools

import jax
import jax.numpy as jnp
from jax import lax
from jax.experimental import pallas as pl
from jax.experimental.pallas import tpu as pltpu

NET_FRAME = [7, 3, 6]      # n_input, n_hidden1, n_output
_SUB = 8                   # sublanes per vreg
_ALIGN = _SUB * 128        # batch-tile granularity = one full (8,128) vreg footprint
_CHUNK = 256               # lanes per inner chunk (keeps h / acc resident in vregs)


def _round_up(x, m):
    return (x + m - 1) // m * m


def _mlp_kernel(w1_ref, b1_ref, w2_ref, b2_ref, x_ref, o_ref):
    """One batch tile; batch packed on (sublane, lane).

    w1_ref: SMEM (n_h, n_in)   -- torch nn.Linear layout (out_features, in_features)
    b1_ref: SMEM (n_h,)
    w2_ref: SMEM (n_out, n_h)
    b2_ref: SMEM (n_out,)
    x_ref:  VMEM (n_in, 8, L)   -- L = tile_b // 8 lanes, multiple of 128
    o_ref:  VMEM (n_out, 8, L)
    """
    n_in, n_h, n_out = NET_FRAME
    L = x_ref.shape[2]
    # Chunk size along lanes; fall back to a single chunk if _CHUNK doesn't divide L.
    chunk = _CHUNK if (L > _CHUNK and L % _CHUNK == 0) else L
    n_chunks = L // chunk

    # Hoist scalar weight reads and bias broadcasts out of the chunk loop.
    w1s = [[w1_ref[j, k] for k in range(n_in)] for j in range(n_h)]
    w2s = [[w2_ref[j, k] for k in range(n_h)] for j in range(n_out)]
    b1v = [jnp.full((_SUB, chunk), b1_ref[j], dtype=jnp.float32) for j in range(n_h)]
    b2v = [jnp.full((_SUB, chunk), b2_ref[j], dtype=jnp.float32) for j in range(n_out)]

    def do_chunk(off):
        if not isinstance(off, int):
            off = pl.multiple_of(off, 128)
        xs = [x_ref[k, :, pl.ds(off, chunk)] for k in range(n_in)]   # (8, chunk) slabs
        # Hidden layer: h_j = relu(b1[j] + sum_k w1[j,k] * x_k)
        h = []
        for j in range(n_h):
            acc = b1v[j]
            for k in range(n_in):
                acc = acc + w1s[j][k] * xs[k]        # VPU broadcast-FMA
            h.append(jnp.maximum(acc, jnp.float32(0.0)))
        # Output layer: o_j = b2[j] + sum_k w2[j,k] * h_k; store row immediately.
        for j in range(n_out):
            acc = b2v[j]
            for k in range(n_h):
                acc = acc + w2s[j][k] * h[k]
            o_ref[j, :, pl.ds(off, chunk)] = acc     # full-lane-width vst

    if n_chunks == 1:
        do_chunk(0)
    else:
        def body(c, carry):
            do_chunk(c * chunk)
            return carry
        lax.fori_loop(0, n_chunks, body, 0, unroll=True)


def _pick_tile(batch, tile_b):
    """Choose the per-grid-step batch tile (multiple of 8*128 lanes)."""
    b_pad_min = _round_up(batch, _ALIGN)
    tb = min(max(tile_b, _ALIGN), b_pad_min)
    if b_pad_min >= 2 * _ALIGN:
        # Keep >= 2 grid steps so the "parallel" axis can feed both v7x TensorCores.
        tb = min(tb, _round_up(b_pad_min // 2, _ALIGN))
    tb = _round_up(tb, _ALIGN)
    b_pad = _round_up(batch, tb)
    return tb, b_pad, b_pad // tb


@functools.partial(jax.jit, static_argnames=("tile_b",))
def net_forward_featmajor(xt, w1, b1, w2, b2, *, tile_b=65536):
    """Feature-major forward: xt is (n_in, B); returns (n_out, B)."""
    n_in, n_h, n_out = NET_FRAME
    assert xt.shape[0] == n_in
    B = xt.shape[1]

    xt = jnp.asarray(xt, jnp.float32)
    w1 = jnp.asarray(w1, jnp.float32)
    b1 = jnp.asarray(b1, jnp.float32)
    w2 = jnp.asarray(w2, jnp.float32)
    b2 = jnp.asarray(b2, jnp.float32)

    tb, b_pad, num_tiles = _pick_tile(B, tile_b)
    L = tb // _SUB

    # Pack batch across (sublane, lane): pad then free row-major reshape.
    xr = jnp.pad(xt, ((0, 0), (0, b_pad - B))).reshape(n_in, _SUB, b_pad // _SUB)

    # Double-buffered in+out blocks + headroom; stay under v7x's 64 MiB/TC.
    vmem_bytes = 2 * (n_in + n_out) * 4 * tb + (4 << 20)
    vmem_limit = int(min(max(vmem_bytes, 16 << 20), 56 << 20))

    out_r = pl.pallas_call(
        _mlp_kernel,
        out_shape=jax.ShapeDtypeStruct((n_out, _SUB, b_pad // _SUB), jnp.float32),
        grid=(num_tiles,),
        in_specs=[
            pl.BlockSpec(memory_space=pltpu.MemorySpace.SMEM),    # w1 (scalar table)
            pl.BlockSpec(memory_space=pltpu.MemorySpace.SMEM),    # b1
            pl.BlockSpec(memory_space=pltpu.MemorySpace.SMEM),    # w2
            pl.BlockSpec(memory_space=pltpu.MemorySpace.SMEM),    # b2
            pl.BlockSpec((n_in, _SUB, L), lambda i: (0, 0, i)),   # x tile
        ],
        out_specs=pl.BlockSpec((n_out, _SUB, L), lambda i: (0, 0, i)),
        compiler_params=pltpu.CompilerParams(
            dimension_semantics=("parallel",),   # shard batch tiles across TCs
            vmem_limit_bytes=vmem_limit,
        ),
        cost_estimate=pl.CostEstimate(
            flops=78 * b_pad, transcendentals=0, bytes_accessed=52 * b_pad),
    )(w1, b1, w2, b2, xr)

    return out_r.reshape(n_out, b_pad)[:, :B]


@functools.partial(jax.jit, static_argnames=("tile_b",))
def net_forward(x, w1, b1, w2, b2, *, tile_b=65536):
    """Batch-major forward matching the PyTorch module: x (B, n_in) -> (B, n_out).

    The transpose/pad/reshape glue lives under the same jit as the kernel so it
    fuses with adjacent XLA ops; use net_forward_featmajor to skip it entirely.
    """
    out_t = net_forward_featmajor(
        jnp.asarray(x, jnp.float32).T, w1, b1, w2, b2, tile_b=tile_b)
    return out_t.T


def init_params(key):
    """Deterministic init mimicking nn.Linear's U(-1/sqrt(fan_in), 1/sqrt(fan_in))."""
    n_in, n_h, n_out = NET_FRAME
    k1, k2, k3, k4 = jax.random.split(key, 4)
    bound1 = 1.0 / jnp.sqrt(jnp.float32(n_in))
    bound2 = 1.0 / jnp.sqrt(jnp.float32(n_h))
    w1 = jax.random.uniform(k1, (n_h, n_in), jnp.float32, -bound1, bound1)
    b1 = jax.random.uniform(k2, (n_h,), jnp.float32, -bound1, bound1)
    w2 = jax.random.uniform(k3, (n_out, n_h), jnp.float32, -bound2, bound2)
    b2 = jax.random.uniform(k4, (n_out,), jnp.float32, -bound2, bound2)
    return w1, b1, w2, b2


def _reference(x, w1, b1, w2, b2):
    return jnp.maximum(x @ w1.T + b1, 0.0) @ w2.T + b2


if __name__ == "__main__":
    key = jax.random.PRNGKey(0)
    k_param, k1, k2, k3 = jax.random.split(key, 4)
    w1, b1, w2, b2 = init_params(k_param)
    n_in, _, n_out = NET_FRAME

    # (1) Tiny batch: single grid step, single chunk, batch padded to 1024 lanes.
    B = 8
    x = jax.random.normal(k1, (B, n_in), jnp.float32)
    out = jax.block_until_ready(net_forward(x, w1, b1, w2, b2))
    assert out.shape == (B, n_out)
    assert jnp.allclose(out, _reference(x, w1, b1, w2, b2), atol=1e-5, rtol=1e-5)

    # (2) Ragged batch: exercises tail padding / slice-off of padded columns.
    B2 = 300
    x2 = jax.random.normal(k2, (B2, n_in), jnp.float32)
    out2 = jax.block_until_ready(net_forward(x2, w1, b1, w2, b2))
    assert out2.shape == (B2, n_out)
    assert jnp.allclose(out2, _reference(x2, w1, b1, w2, b2), atol=1e-5, rtol=1e-5)

    # (3) Multi-tile + multi-chunk path (2 grid steps x 2 inner chunks) via the
    #     feature-major entry point (no boundary transposes).
    B3 = 8192
    x3 = jax.random.normal(k3, (B3, n_in), jnp.float32)
    out3 = jax.block_until_ready(net_forward_featmajor(x3.T, w1, b1, w2, b2))
    assert out3.shape == (n_out, B3)
    assert jnp.allclose(out3.T, _reference(x3, w1, b1, w2, b2), atol=1e-5, rtol=1e-5)

    print("KERNEL_OK")
</pallas_src>

<mosaic_0001>
module attributes {stable_mosaic.version = 11 : i64} {
  func.func @_mlp_kernel(%arg0: i32, %arg1: memref<3x7xf32, #tpu.memory_space<smem>>, %arg2: memref<3xf32, #tpu.memory_space<smem>>, %arg3: memref<6x3xf32, #tpu.memory_space<smem>>, %arg4: memref<6xf32, #tpu.memory_space<smem>>, %arg5: memref<7x8x128xf32, #tpu.memory_space<vmem>>, %arg6: memref<6x8x128xf32, #tpu.memory_space<vmem>>) attributes {dimension_semantics = [#tpu.dimension_semantics<parallel>], iteration_bounds = array<i64: 1>, scalar_prefetch = 0 : i64, scratch_operands = 0 : i64, tpu.core_type = #tpu.core_type<tc>, window_params = [{transform_indices = @transform_0, window_bounds = array<i64: 3, 7>}, {transform_indices = @transform_1, window_bounds = array<i64: 3>}, {transform_indices = @transform_2, window_bounds = array<i64: 6, 3>}, {transform_indices = @transform_3, window_bounds = array<i64: 6>}, {transform_indices = @transform_4, window_bounds = array<i64: 7, 8, 128>}, {transform_indices = @transform_5, window_bounds = array<i64: 6, 8, 128>}]} {
    %c0 = arith.constant 0 : index
    %c0_0 = arith.constant 0 : index
    %0 = memref.load %arg1[%c0, %c0_0] : memref<3x7xf32, #tpu.memory_space<smem>>
    %c0_1 = arith.constant 0 : index
    %c1 = arith.constant 1 : index
    %1 = memref.load %arg1[%c0_1, %c1] : memref<3x7xf32, #tpu.memory_space<smem>>
    %c0_2 = arith.constant 0 : index
    %c2 = arith.constant 2 : index
    %2 = memref.load %arg1[%c0_2, %c2] : memref<3x7xf32, #tpu.memory_space<smem>>
    %c0_3 = arith.constant 0 : index
    %c3 = arith.constant 3 : index
    %3 = memref.load %arg1[%c0_3, %c3] : memref<3x7xf32, #tpu.memory_space<smem>>
    %c0_4 = arith.constant 0 : index
    %c4 = arith.constant 4 : index
    %4 = memref.load %arg1[%c0_4, %c4] : memref<3x7xf32, #tpu.memory_space<smem>>
    %c0_5 = arith.constant 0 : index
    %c5 = arith.constant 5 : index
    %5 = memref.load %arg1[%c0_5, %c5] : memref<3x7xf32, #tpu.memory_space<smem>>
    %c0_6 = arith.constant 0 : index
    %c6 = arith.constant 6 : index
    %6 = memref.load %arg1[%c0_6, %c6] : memref<3x7xf32, #tpu.memory_space<smem>>
    %c1_7 = arith.constant 1 : index
    %c0_8 = arith.constant 0 : index
    %7 = memref.load %arg1[%c1_7, %c0_8] : memref<3x7xf32, #tpu.memory_space<smem>>
    %c1_9 = arith.constant 1 : index
    %c1_10 = arith.constant 1 : index
    %8 = memref.load %arg1[%c1_9, %c1_10] : memref<3x7xf32, #tpu.memory_space<smem>>
    %c1_11 = arith.constant 1 : index
    %c2_12 = arith.constant 2 : index
    %9 = memref.load %arg1[%c1_11, %c2_12] : memref<3x7xf32, #tpu.memory_space<smem>>
    %c1_13 = arith.constant 1 : index
    %c3_14 = arith.constant 3 : index
    %10 = memref.load %arg1[%c1_13, %c3_14] : memref<3x7xf32, #tpu.memory_space<smem>>
    %c1_15 = arith.constant 1 : index
    %c4_16 = arith.constant 4 : index
    %11 = memref.load %arg1[%c1_15, %c4_16] : memref<3x7xf32, #tpu.memory_space<smem>>
    %c1_17 = arith.constant 1 : index
    %c5_18 = arith.constant 5 : index
    %12 = memref.load %arg1[%c1_17, %c5_18] : memref<3x7xf32, #tpu.memory_space<smem>>
    %c1_19 = arith.constant 1 : index
    %c6_20 = arith.constant 6 : index
    %13 = memref.load %arg1[%c1_19, %c6_20] : memref<3x7xf32, #tpu.memory_space<smem>>
    %c2_21 = arith.constant 2 : index
    %c0_22 = arith.constant 0 : index
    %14 = memref.load %arg1[%c2_21, %c0_22] : memref<3x7xf32, #tpu.memory_space<smem>>
    %c2_23 = arith.constant 2 : index
    %c1_24 = arith.constant 1 : index
    %15 = memref.load %arg1[%c2_23, %c1_24] : memref<3x7xf32, #tpu.memory_space<smem>>
    %c2_25 = arith.constant 2 : index
    %c2_26 = arith.constant 2 : index
    %16 = memref.load %arg1[%c2_25, %c2_26] : memref<3x7xf32, #tpu.memory_space<smem>>
    %c2_27 = arith.constant 2 : index
    %c3_28 = arith.constant 3 : index
    %17 = memref.load %arg1[%c2_27, %c3_28] : memref<3x7xf32, #tpu.memory_space<smem>>
    %c2_29 = arith.constant 2 : index
    %c4_30 = arith.constant 4 : index
    %18 = memref.load %arg1[%c2_29, %c4_30] : memref<3x7xf32, #tpu.memory_space<smem>>
    %c2_31 = arith.constant 2 : index
    %c5_32 = arith.constant 5 : index
    %19 = memref.load %arg1[%c2_31, %c5_32] : memref<3x7xf32, #tpu.memory_space<smem>>
    %c2_33 = arith.constant 2 : index
    %c6_34 = arith.constant 6 : index
    %20 = memref.load %arg1[%c2_33, %c6_34] : memref<3x7xf32, #tpu.memory_space<smem>>
    %c0_35 = arith.constant 0 : index
    %c0_36 = arith.constant 0 : index
    %21 = memref.load %arg3[%c0_35, %c0_36] : memref<6x3xf32, #tpu.memory_space<smem>>
    %c0_37 = arith.constant 0 : index
    %c1_38 = arith.constant 1 : index
    %22 = memref.load %arg3[%c0_37, %c1_38] : memref<6x3xf32, #tpu.memory_space<smem>>
    %c0_39 = arith.constant 0 : index
    %c2_40 = arith.constant 2 : index
    %23 = memref.load %arg3[%c0_39, %c2_40] : memref<6x3xf32, #tpu.memory_space<smem>>
    %c1_41 = arith.constant 1 : index
    %c0_42 = arith.constant 0 : index
    %24 = memref.load %arg3[%c1_41, %c0_42] : memref<6x3xf32, #tpu.memory_space<smem>>
    %c1_43 = arith.constant 1 : index
    %c1_44 = arith.constant 1 : index
    %25 = memref.load %arg3[%c1_43, %c1_44] : memref<6x3xf32, #tpu.memory_space<smem>>
    %c1_45 = arith.constant 1 : index
    %c2_46 = arith.constant 2 : index
    %26 = memref.load %arg3[%c1_45, %c2_46] : memref<6x3xf32, #tpu.memory_space<smem>>
    %c2_47 = arith.constant 2 : index
    %c0_48 = arith.constant 0 : index
    %27 = memref.load %arg3[%c2_47, %c0_48] : memref<6x3xf32, #tpu.memory_space<smem>>
    %c2_49 = arith.constant 2 : index
    %c1_50 = arith.constant 1 : index
    %28 = memref.load %arg3[%c2_49, %c1_50] : memref<6x3xf32, #tpu.memory_space<smem>>
    %c2_51 = arith.constant 2 : index
    %c2_52 = arith.constant 2 : index
    %29 = memref.load %arg3[%c2_51, %c2_52] : memref<6x3xf32, #tpu.memory_space<smem>>
    %c3_53 = arith.constant 3 : index
    %c0_54 = arith.constant 0 : index
    %30 = memref.load %arg3[%c3_53, %c0_54] : memref<6x3xf32, #tpu.memory_space<smem>>
    %c3_55 = arith.constant 3 : index
    %c1_56 = arith.constant 1 : index
    %31 = memref.load %arg3[%c3_55, %c1_56] : memref<6x3xf32, #tpu.memory_space<smem>>
    %c3_57 = arith.constant 3 : index
    %c2_58 = arith.constant 2 : index
    %32 = memref.load %arg3[%c3_57, %c2_58] : memref<6x3xf32, #tpu.memory_space<smem>>
    %c4_59 = arith.constant 4 : index
    %c0_60 = arith.constant 0 : index
    %33 = memref.load %arg3[%c4_59, %c0_60] : memref<6x3xf32, #tpu.memory_space<smem>>
    %c4_61 = arith.constant 4 : index
    %c1_62 = arith.constant 1 : index
    %34 = memref.load %arg3[%c4_61, %c1_62] : memref<6x3xf32, #tpu.memory_space<smem>>
    %c4_63 = arith.constant 4 : index
    %c2_64 = arith.constant 2 : index
    %35 = memref.load %arg3[%c4_63, %c2_64] : memref<6x3xf32, #tpu.memory_space<smem>>
    %c5_65 = arith.constant 5 : index
    %c0_66 = arith.constant 0 : index
    %36 = memref.load %arg3[%c5_65, %c0_66] : memref<6x3xf32, #tpu.memory_space<smem>>
    %c5_67 = arith.constant 5 : index
    %c1_68 = arith.constant 1 : index
    %37 = memref.load %arg3[%c5_67, %c1_68] : memref<6x3xf32, #tpu.memory_space<smem>>
    %c5_69 = arith.constant 5 : index
    %c2_70 = arith.constant 2 : index
    %38 = memref.load %arg3[%c5_69, %c2_70] : memref<6x3xf32, #tpu.memory_space<smem>>
    %c0_71 = arith.constant 0 : index
    %39 = memref.load %arg2[%c0_71] : memref<3xf32, #tpu.memory_space<smem>>
    %40 = vector.broadcast %39 : f32 to vector<8x128xf32>
    %c1_72 = arith.constant 1 : index
    %41 = memref.load %arg2[%c1_72] : memref<3xf32, #tpu.memory_space<smem>>
    %42 = vector.broadcast %41 : f32 to vector<8x128xf32>
    %c2_73 = arith.constant 2 : index
    %43 = memref.load %arg2[%c2_73] : memref<3xf32, #tpu.memory_space<smem>>
    %44 = vector.broadcast %43 : f32 to vector<8x128xf32>
    %c0_74 = arith.constant 0 : index
    %45 = memref.load %arg4[%c0_74] : memref<6xf32, #tpu.memory_space<smem>>
    %46 = vector.broadcast %45 : f32 to vector<8x128xf32>
    %c1_75 = arith.constant 1 : index
    %47 = memref.load %arg4[%c1_75] : memref<6xf32, #tpu.memory_space<smem>>
    %48 = vector.broadcast %47 : f32 to vector<8x128xf32>
    %c2_76 = arith.constant 2 : index
    %49 = memref.load %arg4[%c2_76] : memref<6xf32, #tpu.memory_space<smem>>
    %50 = vector.broadcast %49 : f32 to vector<8x128xf32>
    %c3_77 = arith.constant 3 : index
    %51 = memref.load %arg4[%c3_77] : memref<6xf32, #tpu.memory_space<smem>>
    %52 = vector.broadcast %51 : f32 to vector<8x128xf32>
    %c4_78 = arith.constant 4 : index
    %53 = memref.load %arg4[%c4_78] : memref<6xf32, #tpu.memory_space<smem>>
    %54 = vector.broadcast %53 : f32 to vector<8x128xf32>
    %c5_79 = arith.constant 5 : index
    %55 = memref.load %arg4[%c5_79] : memref<6xf32, #tpu.memory_space<smem>>
    %56 = vector.broadcast %55 : f32 to vector<8x128xf32>
    %c0_80 = arith.constant 0 : index
    %c0_81 = arith.constant 0 : index
    %c0_82 = arith.constant 0 : index
    %57 = vector.load %arg5[%c0_80, %c0_81, %c0_82] : memref<7x8x128xf32, #tpu.memory_space<vmem>>, vector<1x8x128xf32>
    %58 = vector.shape_cast %57 : vector<1x8x128xf32> to vector<8x128xf32>
    %c1_83 = arith.constant 1 : index
    %c0_84 = arith.constant 0 : index
    %c0_85 = arith.constant 0 : index
    %59 = vector.load %arg5[%c1_83, %c0_84, %c0_85] : memref<7x8x128xf32, #tpu.memory_space<vmem>>, vector<1x8x128xf32>
    %60 = vector.shape_cast %59 : vector<1x8x128xf32> to vector<8x128xf32>
    %c2_86 = arith.constant 2 : index
    %c0_87 = arith.constant 0 : index
    %c0_88 = arith.constant 0 : index
    %61 = vector.load %arg5[%c2_86, %c0_87, %c0_88] : memref<7x8x128xf32, #tpu.memory_space<vmem>>, vector<1x8x128xf32>
    %62 = vector.shape_cast %61 : vector<1x8x128xf32> to vector<8x128xf32>
    %c3_89 = arith.constant 3 : index
    %c0_90 = arith.constant 0 : index
    %c0_91 = arith.constant 0 : index
    %63 = vector.load %arg5[%c3_89, %c0_90, %c0_91] : memref<7x8x128xf32, #tpu.memory_space<vmem>>, vector<1x8x128xf32>
    %64 = vector.shape_cast %63 : vector<1x8x128xf32> to vector<8x128xf32>
    %c4_92 = arith.constant 4 : index
    %c0_93 = arith.constant 0 : index
    %c0_94 = arith.constant 0 : index
    %65 = vector.load %arg5[%c4_92, %c0_93, %c0_94] : memref<7x8x128xf32, #tpu.memory_space<vmem>>, vector<1x8x128xf32>
    %66 = vector.shape_cast %65 : vector<1x8x128xf32> to vector<8x128xf32>
    %c5_95 = arith.constant 5 : index
    %c0_96 = arith.constant 0 : index
    %c0_97 = arith.constant 0 : index
    %67 = vector.load %arg5[%c5_95, %c0_96, %c0_97] : memref<7x8x128xf32, #tpu.memory_space<vmem>>, vector<1x8x128xf32>
    %68 = vector.shape_cast %67 : vector<1x8x128xf32> to vector<8x128xf32>
    %c6_98 = arith.constant 6 : index
    %c0_99 = arith.constant 0 : index
    %c0_100 = arith.constant 0 : index
    %69 = vector.load %arg5[%c6_98, %c0_99, %c0_100] : memref<7x8x128xf32, #tpu.memory_space<vmem>>, vector<1x8x128xf32>
    %70 = vector.shape_cast %69 : vector<1x8x128xf32> to vector<8x128xf32>
    %71 = vector.broadcast %0 : f32 to vector<8x128xf32>
    %72 = arith.mulf %71, %58 : vector<8x128xf32>
    %73 = arith.addf %40, %72 : vector<8x128xf32>
    %74 = vector.broadcast %1 : f32 to vector<8x128xf32>
    %75 = arith.mulf %74, %60 : vector<8x128xf32>
    %76 = arith.addf %73, %75 : vector<8x128xf32>
    %77 = vector.broadcast %2 : f32 to vector<8x128xf32>
    %78 = arith.mulf %77, %62 : vector<8x128xf32>
    %79 = arith.addf %76, %78 : vector<8x128xf32>
    %80 = vector.broadcast %3 : f32 to vector<8x128xf32>
    %81 = arith.mulf %80, %64 : vector<8x128xf32>
    %82 = arith.addf %79, %81 : vector<8x128xf32>
    %83 = vector.broadcast %4 : f32 to vector<8x128xf32>
    %84 = arith.mulf %83, %66 : vector<8x128xf32>
    %85 = arith.addf %82, %84 : vector<8x128xf32>
    %86 = vector.broadcast %5 : f32 to vector<8x128xf32>
    %87 = arith.mulf %86, %68 : vector<8x128xf32>
    %88 = arith.addf %85, %87 : vector<8x128xf32>
    %89 = vector.broadcast %6 : f32 to vector<8x128xf32>
    %90 = arith.mulf %89, %70 : vector<8x128xf32>
    %91 = arith.addf %88, %90 : vector<8x128xf32>
    %cst = arith.constant 0.000000e+00 : f32
    %92 = vector.broadcast %cst : f32 to vector<8x128xf32>
    %93 = arith.maximumf %91, %92 : vector<8x128xf32>
    %94 = vector.broadcast %7 : f32 to vector<8x128xf32>
    %95 = arith.mulf %94, %58 : vector<8x128xf32>
    %96 = arith.addf %42, %95 : vector<8x128xf32>
    %97 = vector.broadcast %8 : f32 to vector<8x128xf32>
    %98 = arith.mulf %97, %60 : vector<8x128xf32>
    %99 = arith.addf %96, %98 : vector<8x128xf32>
    %100 = vector.broadcast %9 : f32 to vector<8x128xf32>
    %101 = arith.mulf %100, %62 : vector<8x128xf32>
    %102 = arith.addf %99, %101 : vector<8x128xf32>
    %103 = vector.broadcast %10 : f32 to vector<8x128xf32>
    %104 = arith.mulf %103, %64 : vector<8x128xf32>
    %105 = arith.addf %102, %104 : vector<8x128xf32>
    %106 = vector.broadcast %11 : f32 to vector<8x128xf32>
    %107 = arith.mulf %106, %66 : vector<8x128xf32>
    %108 = arith.addf %105, %107 : vector<8x128xf32>
    %109 = vector.broadcast %12 : f32 to vector<8x128xf32>
    %110 = arith.mulf %109, %68 : vector<8x128xf32>
    %111 = arith.addf %108, %110 : vector<8x128xf32>
    %112 = vector.broadcast %13 : f32 to vector<8x128xf32>
    %113 = arith.mulf %112, %70 : vector<8x128xf32>
    %114 = arith.addf %111, %113 : vector<8x128xf32>
    %cst_101 = arith.constant 0.000000e+00 : f32
    %115 = vector.broadcast %cst_101 : f32 to vector<8x128xf32>
    %116 = arith.maximumf %114, %115 : vector<8x128xf32>
    %117 = vector.broadcast %14 : f32 to vector<8x128xf32>
    %118 = arith.mulf %117, %58 : vector<8x128xf32>
    %119 = arith.addf %44, %118 : vector<8x128xf32>
    %120 = vector.broadcast %15 : f32 to vector<8x128xf32>
    %121 = arith.mulf %120, %60 : vector<8x128xf32>
    %122 = arith.addf %119, %121 : vector<8x128xf32>
    %123 = vector.broadcast %16 : f32 to vector<8x128xf32>
    %124 = arith.mulf %123, %62 : vector<8x128xf32>
    %125 = arith.addf %122, %124 : vector<8x128xf32>
    %126 = vector.broadcast %17 : f32 to vector<8x128xf32>
    %127 = arith.mulf %126, %64 : vector<8x128xf32>
    %128 = arith.addf %125, %127 : vector<8x128xf32>
    %129 = vector.broadcast %18 : f32 to vector<8x128xf32>
    %130 = arith.mulf %129, %66 : vector<8x128xf32>
    %131 = arith.addf %128, %130 : vector<8x128xf32>
    %132 = vector.broadcast %19 : f32 to vector<8x128xf32>
    %133 = arith.mulf %132, %68 : vector<8x128xf32>
    %134 = arith.addf %131, %133 : vector<8x128xf32>
    %135 = vector.broadcast %20 : f32 to vector<8x128xf32>
    %136 = arith.mulf %135, %70 : vector<8x128xf32>
    %137 = arith.addf %134, %136 : vector<8x128xf32>
    %cst_102 = arith.constant 0.000000e+00 : f32
    %138 = vector.broadcast %cst_102 : f32 to vector<8x128xf32>
    %139 = arith.maximumf %137, %138 : vector<8x128xf32>
    %140 = vector.broadcast %21 : f32 to vector<8x128xf32>
    %141 = arith.mulf %140, %93 : vector<8x128xf32>
    %142 = arith.addf %46, %141 : vector<8x128xf32>
    %143 = vector.broadcast %22 : f32 to vector<8x128xf32>
    %144 = arith.mulf %143, %116 : vector<8x128xf32>
    %145 = arith.addf %142, %144 : vector<8x128xf32>
    %146 = vector.broadcast %23 : f32 to vector<8x128xf32>
    %147 = arith.mulf %146, %139 : vector<8x128xf32>
    %148 = arith.addf %145, %147 : vector<8x128xf32>
    %c0_103 = arith.constant 0 : index
    %c0_104 = arith.constant 0 : index
    %c0_105 = arith.constant 0 : index
    %149 = vector.load %arg6[%c0_103, %c0_104, %c0_105] : memref<6x8x128xf32, #tpu.memory_space<vmem>>, vector<1x8x128xf32>
    %150 = vector.shape_cast %149 : vector<1x8x128xf32> to vector<8x128xf32>
    %151 = vector.shape_cast %148 : vector<8x128xf32> to vector<1x8x128xf32>
    tpu.vector_store %arg6[%c0_103, %c0_104, %c0_105], %151 {strides = array<i32>} : memref<6x8x128xf32, #tpu.memory_space<vmem>>, vector<1x8x128xf32>,
    %152 = vector.broadcast %24 : f32 to vector<8x128xf32>
    %153 = arith.mulf %152, %93 : vector<8x128xf32>
    %154 = arith.addf %48, %153 : vector<8x128xf32>
    %155 = vector.broadcast %25 : f32 to vector<8x128xf32>
    %156 = arith.mulf %155, %116 : vector<8x128xf32>
    %157 = arith.addf %154, %156 : vector<8x128xf32>
    %158 = vector.broadcast %26 : f32 to vector<8x128xf32>
    %159 = arith.mulf %158, %139 : vector<8x128xf32>
    %160 = arith.addf %157, %159 : vector<8x128xf32>
    %c1_106 = arith.constant 1 : index
    %c0_107 = arith.constant 0 : index
    %c0_108 = arith.constant 0 : index
    %161 = vector.load %arg6[%c1_106, %c0_107, %c0_108] : memref<6x8x128xf32, #tpu.memory_space<vmem>>, vector<1x8x128xf32>
    %162 = vector.shape_cast %161 : vector<1x8x128xf32> to vector<8x128xf32>
    %163 = vector.shape_cast %160 : vector<8x128xf32> to vector<1x8x128xf32>
    tpu.vector_store %arg6[%c1_106, %c0_107, %c0_108], %163 {strides = array<i32>} : memref<6x8x128xf32, #tpu.memory_space<vmem>>, vector<1x8x128xf32>,
    %164 = vector.broadcast %27 : f32 to vector<8x128xf32>
    %165 = arith.mulf %164, %93 : vector<8x128xf32>
    %166 = arith.addf %50, %165 : vector<8x128xf32>
    %167 = vector.broadcast %28 : f32 to vector<8x128xf32>
    %168 = arith.mulf %167, %116 : vector<8x128xf32>
    %169 = arith.addf %166, %168 : vector<8x128xf32>
    %170 = vector.broadcast %29 : f32 to vector<8x128xf32>
    %171 = arith.mulf %170, %139 : vector<8x128xf32>
    %172 = arith.addf %169, %171 : vector<8x128xf32>
    %c2_109 = arith.constant 2 : index
    %c0_110 = arith.constant 0 : index
    %c0_111 = arith.constant 0 : index
    %173 = vector.load %arg6[%c2_109, %c0_110, %c0_111] : memref<6x8x128xf32, #tpu.memory_space<vmem>>, vector<1x8x128xf32>
    %174 = vector.shape_cast %173 : vector<1x8x128xf32> to vector<8x128xf32>
    %175 = vector.shape_cast %172 : vector<8x128xf32> to vector<1x8x128xf32>
    tpu.vector_store %arg6[%c2_109, %c0_110, %c0_111], %175 {strides = array<i32>} : memref<6x8x128xf32, #tpu.memory_space<vmem>>, vector<1x8x128xf32>,
    %176 = vector.broadcast %30 : f32 to vector<8x128xf32>
    %177 = arith.mulf %176, %93 : vector<8x128xf32>
    %178 = arith.addf %52, %177 : vector<8x128xf32>
    %179 = vector.broadcast %31 : f32 to vector<8x128xf32>
    %180 = arith.mulf %179, %116 : vector<8x128xf32>
    %181 = arith.addf %178, %180 : vector<8x128xf32>
    %182 = vector.broadcast %32 : f32 to vector<8x128xf32>
    %183 = arith.mulf %182, %139 : vector<8x128xf32>
    %184 = arith.addf %181, %183 : vector<8x128xf32>
    %c3_112 = arith.constant 3 : index
    %c0_113 = arith.constant 0 : index
    %c0_114 = arith.constant 0 : index
    %185 = vector.load %arg6[%c3_112, %c0_113, %c0_114] : memref<6x8x128xf32, #tpu.memory_space<vmem>>, vector<1x8x128xf32>
    %186 = vector.shape_cast %185 : vector<1x8x128xf32> to vector<8x128xf32>
    %187 = vector.shape_cast %184 : vector<8x128xf32> to vector<1x8x128xf32>
    tpu.vector_store %arg6[%c3_112, %c0_113, %c0_114], %187 {strides = array<i32>} : memref<6x8x128xf32, #tpu.memory_space<vmem>>, vector<1x8x128xf32>,
    %188 = vector.broadcast %33 : f32 to vector<8x128xf32>
    %189 = arith.mulf %188, %93 : vector<8x128xf32>
    %190 = arith.addf %54, %189 : vector<8x128xf32>
    %191 = vector.broadcast %34 : f32 to vector<8x128xf32>
    %192 = arith.mulf %191, %116 : vector<8x128xf32>
    %193 = arith.addf %190, %192 : vector<8x128xf32>
    %194 = vector.broadcast %35 : f32 to vector<8x128xf32>
    %195 = arith.mulf %194, %139 : vector<8x128xf32>
    %196 = arith.addf %193, %195 : vector<8x128xf32>
    %c4_115 = arith.constant 4 : index
    %c0_116 = arith.constant 0 : index
    %c0_117 = arith.constant 0 : index
    %197 = vector.load %arg6[%c4_115, %c0_116, %c0_117] : memref<6x8x128xf32, #tpu.memory_space<vmem>>, vector<1x8x128xf32>
    %198 = vector.shape_cast %197 : vector<1x8x128xf32> to vector<8x128xf32>
    %199 = vector.shape_cast %196 : vector<8x128xf32> to vector<1x8x128xf32>
    tpu.vector_store %arg6[%c4_115, %c0_116, %c0_117], %199 {strides = array<i32>} : memref<6x8x128xf32, #tpu.memory_space<vmem>>, vector<1x8x128xf32>,
    %200 = vector.broadcast %36 : f32 to vector<8x128xf32>
    %201 = arith.mulf %200, %93 : vector<8x128xf32>
    %202 = arith.addf %56, %201 : vector<8x128xf32>
    %203 = vector.broadcast %37 : f32 to vector<8x128xf32>
    %204 = arith.mulf %203, %116 : vector<8x128xf32>
    %205 = arith.addf %202, %204 : vector<8x128xf32>
    %206 = vector.broadcast %38 : f32 to vector<8x128xf32>
    %207 = arith.mulf %206, %139 : vector<8x128xf32>
    %208 = arith.addf %205, %207 : vector<8x128xf32>
    %c5_118 = arith.constant 5 : index
    %c0_119 = arith.constant 0 : index
    %c0_120 = arith.constant 0 : index
    %209 = vector.load %arg6[%c5_118, %c0_119, %c0_120] : memref<6x8x128xf32, #tpu.memory_space<vmem>>, vector<1x8x128xf32>
    %210 = vector.shape_cast %209 : vector<1x8x128xf32> to vector<8x128xf32>
    %211 = vector.shape_cast %208 : vector<8x128xf32> to vector<1x8x128xf32>
    tpu.vector_store %arg6[%c5_118, %c0_119, %c0_120], %211 {strides = array<i32>} : memref<6x8x128xf32, #tpu.memory_space<vmem>>, vector<1x8x128xf32>,
    return
  }
  func.func @transform_0(%arg0: i32) -> (i32, i32) {
    %c0_i32 = arith.constant 0 : i32
    %c0_i32_0 = arith.constant 0 : i32
    %c0_i32_1 = arith.constant 0 : i32
    return %c0_i32, %c0_i32_0 : i32, i32
  }
  func.func @transform_1(%arg0: i32) -> i32 {
    %c0_i32 = arith.constant 0 : i32
    %c0_i32_0 = arith.constant 0 : i32
    return %c0_i32 : i32
  }
  func.func @transform_2(%arg0: i32) -> (i32, i32) {
    %c0_i32 = arith.constant 0 : i32
    %c0_i32_0 = arith.constant 0 : i32
    %c0_i32_1 = arith.constant 0 : i32
    return %c0_i32, %c0_i32_0 : i32, i32
  }
  func.func @transform_3(%arg0: i32) -> i32 {
    %c0_i32 = arith.constant 0 : i32
    %c0_i32_0 = arith.constant 0 : i32
    return %c0_i32 : i32
  }
  func.func @transform_4(%arg0: i32) -> (i32, i32, i32) {
    %c0_i32 = arith.constant 0 : i32
    %c0_i32_0 = arith.constant 0 : i32
    %c0_i32_1 = arith.constant 0 : i32
    return %c0_i32, %c0_i32_0, %arg0 : i32, i32, i32
  }
  func.func @transform_5(%arg0: i32) -> (i32, i32, i32) {
    %c0_i32 = arith.constant 0 : i32
    %c0_i32_0 = arith.constant 0 : i32
    %c0_i32_1 = arith.constant 0 : i32
    return %c0_i32, %c0_i32_0, %arg0 : i32, i32, i32
  }
}

</mosaic_0001>

<llo_original>
// kernel: net_forward_featmajor.1
$region0: #{net_forward_featmajor.1}
  #allocation0 [shape = 'u32[]', space=smem, size = 0x4, offset = 0x4, fixed_abs, tag = 'smem constant byte address 0x4 - core index']
  #allocation1 [shape = 'u32[144,128]{1,0:T(1,128)}', space=vmem, size = 0x12000, scoped, tag = 'internal scratch']
  %s0 = inlined_call_operand.vmem [shape: f32[3,7], index: 0, kind: input, shape index: {}]
  %s1 = inlined_call_operand.vmem [shape: f32[3], index: 1, kind: input, shape index: {}]
  %s2 = inlined_call_operand.vmem [shape: f32[6,3], index: 2, kind: input, shape index: {}]
  %s3 = inlined_call_operand.vmem [shape: f32[6], index: 3, kind: input, shape index: {}]
  %s4 = inlined_call_operand.vmem [shape: f32[7,8,128], index: 4, kind: input, shape index: {}]
  %s5 = inlined_call_operand.vmem [shape: f32[6,8,128], index: 5, kind: output, shape index: {}]
  %s6 = sld [smem:[#allocation0]]
  $region46: #{net_forward_featmajor.1} parent=0
    _
  %s8 = ssub.s32 1, %s6
  %s9 = scalar_select 0, %s8, %s6
  $region1: #{net_forward_featmajor.1} parent=0
    #allocation2 [shape = 'u8[2048]{0}', space=smem, size = 0x800, scoped, tag = 'input window, operand 0, single buffered']
    #allocation3 [shape = 's32[1]{0}', space=sflag, size = 0x4, scoped, tag = 'scoped memory for net_forward_featmajor.1']
    #allocation4 [shape = 'u8[512]{0}', space=smem, size = 0x200, scoped, tag = 'input window, operand 1, single buffered']
    #allocation5 [shape = 's32[1]{0}', space=sflag, size = 0x4, scoped, tag = 'scoped memory for net_forward_featmajor.1']
    #allocation6 [shape = 'u8[4096]{0}', space=smem, size = 0x1000, scoped, tag = 'input window, operand 2, single buffered']
    #allocation7 [shape = 'u8[512]{0}', space=smem, size = 0x200, scoped, tag = 'input window, operand 3, single buffered']
    #allocation8 [shape = 's32[1]{0}', space=sflag, size = 0x4, scoped, tag = 'scoped memory for net_forward_featmajor.1']
    %10 = vsyncpa [#allocation3], 0
    %11 = vsyncpa [#allocation5], 0
    %12 = vsyncpa [#allocation8], 0
    // Predicated region
    $region2: #{net_forward_featmajor.1} parent=1 // pred_check
      _
    $region3: #{net_forward_featmajor.1} parent=1 // pred_check_branch
      %14 = sbr.rel (0) target = $region5
    $region4: #{net_forward_featmajor.1} parent=1 // pred_region
      %s16 = ssub.s32 64, 64
      %17 = vsyncadd [#allocation3], %s16
      %s19 = sshll.u32 %s0, 4
      %s20 = int_to_ptr.vmem [resolvable:$true] %s19
      %22 = dma.vmem_to_smem %s20, 64, [#allocation2], [#allocation3]
    $region5: #{net_forward_featmajor.1} parent=1 // pred_fallthru
      _
    // Predicated region
    $region6: #{net_forward_featmajor.1} parent=1 // pred_check
      _
    $region7: #{net_forward_featmajor.1} parent=1 // pred_check_branch
      %24 = sbr.rel (0) target = $region9
    $region8: #{net_forward_featmajor.1} parent=1 // pred_region
      %s26 = ssub.s32 16, 16
      %27 = vsyncadd [#allocation5], %s26
      %s29 = sshll.u32 %s1, 4
      %s30 = int_to_ptr.vmem [resolvable:$true] %s29
      %32 = dma.vmem_to_smem %s30, 16, [#allocation4], [#allocation5]
    $region9: #{net_forward_featmajor.1} parent=1 // pred_fallthru
      _
    // Predicated region
    $region10: #{net_forward_featmajor.1} parent=1 // pred_check
      _
    $region11: #{net_forward_featmajor.1} parent=1 // pred_check_branch
      %34 = sbr.rel (0) target = $region13
    $region12: #{net_forward_featmajor.1} parent=1 // pred_region
      %s36 = ssub.s32 128, 128
      %37 = vsyncadd [#allocation5], %s36
      %s39 = sshll.u32 %s2, 4
      %s40 = int_to_ptr.vmem [resolvable:$true] %s39
      %42 = dma.vmem_to_smem %s40, 128, [#allocation6], [#allocation5]
    $region13: #{net_forward_featmajor.1} parent=1 // pred_fallthru
      _
    // Predicated region
    $region14: #{net_forward_featmajor.1} parent=1 // pred_check
      _
    $region15: #{net_forward_featmajor.1} parent=1 // pred_check_branch
      %44 = sbr.rel (0) target = $region17
    $region16: #{net_forward_featmajor.1} parent=1 // pred_region
      %s46 = ssub.s32 16, 16
      %47 = vsyncadd [#allocation8], %s46
      %s49 = sshll.u32 %s3, 4
      %s50 = int_to_ptr.vmem [resolvable:$true] %s49
      %52 = dma.vmem_to_smem %s50, 16, [#allocation7], [#allocation8]
    $region17: #{net_forward_featmajor.1} parent=1 // pred_fallthru
      _
    // Predicated region
    $region18: #{net_forward_featmajor.1} parent=1 // pred_check
      _
    $region19: #{net_forward_featmajor.1} parent=1 // pred_check_branch
      %54 = sbr.rel (0) target = $region21
    $region20: #{net_forward_featmajor.1} parent=1 // pred_region
      _
    $region21: #{net_forward_featmajor.1} parent=1 // pred_fallthru
      _
    // Predicated region
    $region22: #{net_forward_featmajor.1} parent=1 // pred_check
      _
    $region23: #{net_forward_featmajor.1} parent=1 // pred_check_branch
      %56 = sbr.rel (0) target = $region25
    $region24: #{net_forward_featmajor.1} parent=1 // pred_region
      %57 = dma.done [#allocation3], 64
    $region25: #{net_forward_featmajor.1} parent=1 // pred_fallthru
      _
    // Predicated region
    $region26: #{net_forward_featmajor.1} parent=1 // pred_check
      _
    $region27: #{net_forward_featmajor.1} parent=1 // pred_check_branch
      %59 = sbr.rel (0) target = $region29
    $region28: #{net_forward_featmajor.1} parent=1 // pred_region
      %60 = dma.done [#allocation5], 16
    $region29: #{net_forward_featmajor.1} parent=1 // pred_fallthru
      _
    // Predicated region
    $region30: #{net_forward_featmajor.1} parent=1 // pred_check
      _
    $region31: #{net_forward_featmajor.1} parent=1 // pred_check_branch
      %62 = sbr.rel (0) target = $region33
    $region32: #{net_forward_featmajor.1} parent=1 // pred_region
      %63 = dma.done [#allocation5], 128
    $region33: #{net_forward_featmajor.1} parent=1 // pred_fallthru
      _
    // Predicated region
    $region34: #{net_forward_featmajor.1} parent=1 // pred_check
      _
    $region35: #{net_forward_featmajor.1} parent=1 // pred_check_branch
      %65 = sbr.rel (0) target = $region37
    $region36: #{net_forward_featmajor.1} parent=1 // pred_region
      %66 = dma.done [#allocation8], 16
    $region37: #{net_forward_featmajor.1} parent=1 // pred_fallthru
      _
    %67 = sfence
    %s68 = sld [smem:[#allocation2]]
    %s69 = sld [smem:[#allocation2 + $0x1]]
    %s70 = sld [smem:[#allocation2 + $0x2]]
    %s71 = sld [smem:[#allocation2 + $0x3]]
    %s72 = sld [smem:[#allocation2 + $0x4]]
    %s73 = sld [smem:[#allocation2 + $0x5]]
    %s74 = sld [smem:[#allocation2 + $0x6]]
    %s75 = sld [smem:[#allocation2 + $0x80]]
    %s76 = sld [smem:[#allocation2 + $0x81]]
    %s77 = sld [smem:[#allocation2 + $0x82]]
    %s78 = sld [smem:[#allocation2 + $0x83]]
    %s79 = sld [smem:[#allocation2 + $0x84]]
    %s80 = sld [smem:[#allocation2 + $0x85]]
    %s81 = sld [smem:[#allocation2 + $0x86]]
    %s82 = sld [smem:[#allocation2 + $0x100]]
    %s83 = sld [smem:[#allocation2 + $0x101]]
    %s84 = sld [smem:[#allocation2 + $0x102]]
    %s85 = sld [smem:[#allocation2 + $0x103]]
    %s86 = sld [smem:[#allocation2 + $0x104]]
    %s87 = sld [smem:[#allocation2 + $0x105]]
    %s88 = sld [smem:[#allocation2 + $0x106]]
    %s89 = sld [smem:[#allocation6]]
    %s90 = sld [smem:[#allocation6 + $0x1]]
    %s91 = sld [smem:[#allocation6 + $0x2]]
    %s92 = sld [smem:[#allocation6 + $0x80]]
    %s93 = sld [smem:[#allocation6 + $0x81]]
    %s94 = sld [smem:[#allocation6 + $0x82]]
    %s95 = sld [smem:[#allocation6 + $0x100]]
    %s96 = sld [smem:[#allocation6 + $0x101]]
    %s97 = sld [smem:[#allocation6 + $0x102]]
    %s98 = sld [smem:[#allocation6 + $0x180]]
    %s99 = sld [smem:[#allocation6 + $0x181]]
    %s100 = sld [smem:[#allocation6 + $0x182]]
    %s101 = sld [smem:[#allocation6 + $0x200]]
    %s102 = sld [smem:[#allocation6 + $0x201]]
    %s103 = sld [smem:[#allocation6 + $0x202]]
    %s104 = sld [smem:[#allocation6 + $0x280]]
    %s105 = sld [smem:[#allocation6 + $0x281]]
    %s106 = sld [smem:[#allocation6 + $0x282]]
    %s107 = sld [smem:[#allocation4]]
    %v108 = vstv %s107
    %s109 = sld [smem:[#allocation4 + $0x1]]
    %v110 = vstv %s109
    %s111 = sld [smem:[#allocation4 + $0x2]]
    %v112 = vstv %s111
    %s113 = sld [smem:[#allocation7]]
    %v114 = vstv %s113
    %s115 = sld [smem:[#allocation7 + $0x1]]
    %v116 = vstv %s115
    %s117 = sld [smem:[#allocation7 + $0x2]]
    %v118 = vstv %s117
    %s119 = sld [smem:[#allocation7 + $0x3]]
    %v120 = vstv %s119
    %s121 = sld [smem:[#allocation7 + $0x4]]
    %v122 = vstv %s121
    %s123 = sld [smem:[#allocation7 + $0x5]]
    %v124 = vstv %s123
    %v125 = vld [vmem:[%s4] sm:$0xff]
    %s126 = scalar_lea.vmem %s4, 8
    %v127 = vld [vmem:[%s126] sm:$0xff]
    %s128 = scalar_lea.vmem %s4, 16
    %v129 = vld [vmem:[%s128] sm:$0xff]
    %s130 = scalar_lea.vmem %s4, 24
    %v131 = vld [vmem:[%s130] sm:$0xff]
    %s132 = scalar_lea.vmem %s4, 32
    %v133 = vld [vmem:[%s132] sm:$0xff]
    %s134 = scalar_lea.vmem %s4, 40
    %v135 = vld [vmem:[%s134] sm:$0xff]
    %s136 = scalar_lea.vmem %s4, 48
    %v137 = vld [vmem:[%s136] sm:$0xff]
    %v138 = vstv %s68
    %v139 = vmul.f32 %v138, %v125
    %v140 = vadd.f32 %v108, %v139
    %v141 = vstv %s69
    %v142 = vmul.f32 %v141, %v127
    %v143 = vadd.f32 %v140, %v142
    %v144 = vstv %s70
    %v145 = vmul.f32 %v144, %v129
    %v146 = vadd.f32 %v143, %v145
    %v147 = vstv %s71
    %v148 = vmul.f32 %v147, %v131
    %v149 = vadd.f32 %v146, %v148
    %v150 = vstv %s72
    %v151 = vmul.f32 %v150, %v133
    %v152 = vadd.f32 %v149, %v151
    %v153 = vstv %s73
    %v154 = vmul.f32 %v153, %v135
    %v155 = vadd.f32 %v152, %v154
    %v156 = vstv %s74
    %v157 = vmul.f32 %v156, %v137
    %v158 = vadd.f32 %v155, %v157
    %v159 = vmax.f32 %v158, 0.0
    %v160 = vstv %s75
    %v161 = vmul.f32 %v160, %v125
    %v162 = vadd.f32 %v110, %v161
    %v163 = vstv %s76
    %v164 = vmul.f32 %v163, %v127
    %v165 = vadd.f32 %v162, %v164
    %v166 = vstv %s77
    %v167 = vmul.f32 %v166, %v129
    %v168 = vadd.f32 %v165, %v167
    %v169 = vstv %s78
    %v170 = vmul.f32 %v169, %v131
    %v171 = vadd.f32 %v168, %v170
    %v172 = vstv %s79
    %v173 = vmul.f32 %v172, %v133
    %v174 = vadd.f32 %v171, %v173
    %v175 = vstv %s80
    %v176 = vmul.f32 %v175, %v135
    %v177 = vadd.f32 %v174, %v176
    %v178 = vstv %s81
    %v179 = vmul.f32 %v178, %v137
    %v180 = vadd.f32 %v177, %v179
    %v181 = vmax.f32 %v180, 0.0
    %v182 = vstv %s82
    %v183 = vmul.f32 %v182, %v125
    %v184 = vadd.f32 %v112, %v183
    %v185 = vstv %s83
    %v186 = vmul.f32 %v185, %v127
    %v187 = vadd.f32 %v184, %v186
    %v188 = vstv %s84
    %v189 = vmul.f32 %v188, %v129
    %v190 = vadd.f32 %v187, %v189
    %v191 = vstv %s85
    %v192 = vmul.f32 %v191, %v131
    %v193 = vadd.f32 %v190, %v192
    %v194 = vstv %s86
    %v195 = vmul.f32 %v194, %v133
    %v196 = vadd.f32 %v193, %v195
    %v197 = vstv %s87
    %v198 = vmul.f32 %v197, %v135
    %v199 = vadd.f32 %v196, %v198
    %v200 = vstv %s88
    %v201 = vmul.f32 %v200, %v137
    %v202 = vadd.f32 %v199, %v201
    %v203 = vmax.f32 %v202, 0.0
    %v204 = vstv %s89
    %v205 = vmul.f32 %v204, %v159
    %v206 = vadd.f32 %v114, %v205
    %v207 = vstv %s90
    %v208 = vmul.f32 %v207, %v181
    %v209 = vadd.f32 %v206, %v208
    %v210 = vstv %s91
    %v211 = vmul.f32 %v210, %v203
    %v212 = vadd.f32 %v209, %v211
    %213 = vst [vmem:[%s5] sm:$0xff] %v212
    %v214 = vstv %s92
    %v215 = vmul.f32 %v214, %v159
    %v216 = vadd.f32 %v116, %v215
    %v217 = vstv %s93
    %v218 = vmul.f32 %v217, %v181
    %v219 = vadd.f32 %v216, %v218
    %v220 = vstv %s94
    %v221 = vmul.f32 %v220, %v203
    %v222 = vadd.f32 %v219, %v221
    %s223 = scalar_lea.vmem %s5, 8
    %224 = vst [vmem:[%s223] sm:$0xff] %v222
    %v225 = vstv %s95
    %v226 = vmul.f32 %v225, %v159
    %v227 = vadd.f32 %v118, %v226
    %v228 = vstv %s96
    %v229 = vmul.f32 %v228, %v181
    %v230 = vadd.f32 %v227, %v229
    %v231 = vstv %s97
    %v232 = vmul.f32 %v231, %v203
    %v233 = vadd.f32 %v230, %v232
    %s234 = scalar_lea.vmem %s5, 16
    %235 = vst [vmem:[%s234] sm:$0xff] %v233
    %v236 = vstv %s98
    %v237 = vmul.f32 %v236, %v159
    %v238 = vadd.f32 %v120, %v237
    %v239 = vstv %s99
    %v240 = vmul.f32 %v239, %v181
    %v241 = vadd.f32 %v238, %v240
    %v242 = vstv %s100
    %v243 = vmul.f32 %v242, %v203
    %v244 = vadd.f32 %v241, %v243
    %s245 = scalar_lea.vmem %s5, 24
    %246 = vst [vmem:[%s245] sm:$0xff] %v244
    %v247 = vstv %s101
    %v248 = vmul.f32 %v247, %v159
    %v249 = vadd.f32 %v122, %v248
    %v250 = vstv %s102
    %v251 = vmul.f32 %v250, %v181
    %v252 = vadd.f32 %v249, %v251
    %v253 = vstv %s103
    %v254 = vmul.f32 %v253, %v203
    %v255 = vadd.f32 %v252, %v254
    %s256 = scalar_lea.vmem %s5, 32
    %257 = vst [vmem:[%s256] sm:$0xff] %v255
    %v258 = vstv %s104
    %v259 = vmul.f32 %v258, %v159
    %v260 = vadd.f32 %v124, %v259
    %v261 = vstv %s105
    %v262 = vmul.f32 %v261, %v181
    %v263 = vadd.f32 %v260, %v262
    %v264 = vstv %s106
    %v265 = vmul.f32 %v264, %v203
    %v266 = vadd.f32 %v263, %v265
    %s267 = scalar_lea.vmem %s5, 40
    %268 = vst [vmem:[%s267] sm:$0xff] %v266
    // Predicated region
    $region38: #{net_forward_featmajor.1} parent=1 // pred_check
      _
    $region39: #{net_forward_featmajor.1} parent=1 // pred_check_branch
      %270 = sbr.rel (0) target = $region41
    $region40: #{net_forward_featmajor.1} parent=1 // pred_region
      _
    $region41: #{net_forward_featmajor.1} parent=1 // pred_fallthru
      _
    // Predicated region
    $region42: #{net_forward_featmajor.1} parent=1 // pred_check
      _
    $region43: #{net_forward_featmajor.1} parent=1 // pred_check_branch
      %272 = sbr.rel (0) target = $region45
    $region44: #{net_forward_featmajor.1} parent=1 // pred_region
      _
    $region45: #{net_forward_featmajor.1} parent=1 // pred_fallthru
      _
    %273 = vsyncpa [#allocation3], 1
    %274 = vsyncpa [#allocation5], 1
    %275 = vsyncpa [#allocation8], 1

</llo_original>
